<compile_context>
chip_gen: v7x
topology: tpu7x:2x2x1
jax: 0.10.0
libtpu: 0.0.40
codegen_flags: <defaults>
</compile_context>

<pallas_src>
import functools

import jax
import jax.numpy as jnp
from jax.experimental import pallas as pl
from jax.experimental.pallas import tpu as pltpu


def _round_up(x: int, m: int) -> int:
    return ((x + m - 1) // m) * m


def _vmem_capacity_bytes() -> int:
    try:
        cap = int(pltpu.get_tpu_info().vmem_capacity_bytes)
        if cap > 0:
            return cap
    except Exception:
        pass
    return 64 << 20  # conservative fallback (v7x per-TensorCore VMEM)


_VMEM_CAP = _vmem_capacity_bytes()


def _proj_kernel(x_ref, w_ref, b_ref, o_ref, acc_ref):
    # x_ref : (tm, tk)  activation tile
    # w_ref : (tk, tn)  weight tile, already (K, N)-major -> straight MXU feed
    # b_ref : (1,  tn)  bias tile
    # o_ref : (tm, tn)  output tile (resident across the K axis)
    # acc   : (tm, tn)  f32 accumulator scratch
    @pl.when(pl.program_id(2) == 0)
    def _():
        acc_ref[...] = jnp.zeros_like(acc_ref)

    acc_ref[...] += jnp.dot(x_ref[...], w_ref[...],
                            preferred_element_type=jnp.float32)

    @pl.when(pl.program_id(2) == pl.num_programs(2) - 1)
    def _():
        o_ref[...] = (acc_ref[...] + b_ref[...].astype(jnp.float32)
                      ).astype(o_ref.dtype)


@functools.partial(jax.jit, static_argnames=("patch_len", "tm", "tn", "tk"))
def latent_patching_projection(x, weight, bias, *, patch_len,
                               tm=1024, tn=512, tk=None):
    """x: (B, L, D_latent); weight: (d_llm, patch_len*D_latent); bias: (d_llm,).

    Returns (B, L // patch_len, d_llm)."""
    B, L, D = x.shape
    assert L % patch_len == 0, "sequence length must be divisible by patch_len"
    P = L // patch_len
    K = patch_len * D
    N = weight.shape[0]
    M = B * P

    # glue: rearrange 'b (p l) d -> b p (l d)' then flatten batch*patches.
    x2 = x.reshape(M, K)
    # One transpose pass to (K, N): kernel stays on the [tm,K]x[K,tn] MXU
    # fast path (no per-step XLU transpose of the weight tile).
    wT = weight.T
    b2 = bias.reshape(1, N)

    # ---- dtype-aware alignment & per-operand itemsizes ----
    xi = jnp.dtype(x.dtype).itemsize
    wi = jnp.dtype(weight.dtype).itemsize
    bi = jnp.dtype(bias.dtype).itemsize
    oi = xi                                   # output dtype == x.dtype
    sub = max(8, 32 // xi)                    # 8 f32 / 16 bf16 / 32 int8,fp8

    m_min = _round_up(M, sub)
    n_min = _round_up(N, 128)                 # lane-dense weight / output
    k_min = _round_up(K, 128)                 # lane-dense activations

    # ---- balanced M / N tiles (padding never approaches a full tile) ----
    gm = pl.cdiv(m_min, max(1, min(tm, m_min)))
    tm_eff = _round_up(pl.cdiv(m_min, gm), sub)
    gn = pl.cdiv(n_min, max(128, min(_round_up(tn, 128), n_min)))
    tn_eff = _round_up(pl.cdiv(n_min, gn), 128)

    # ---- keep both TensorCores busy on 2-TC parts (v7x) ----
    if pl.cdiv(m_min, tm_eff) * pl.cdiv(n_min, tn_eff) < 2:
        if m_min >= 2 * sub:
            tm_eff = _round_up(pl.cdiv(m_min, 2), sub)
        elif n_min >= 2 * 128:
            tn_eff = _round_up(pl.cdiv(n_min, 2), 128)

    # ---- size against actual VMEM; add a K axis instead of shrinking tm ----
    budget = _VMEM_CAP * 3 // 4

    def _max_tk(tm_, tn_):
        fixed = 2 * tn_ * bi + 2 * tm_ * tn_ * oi + tm_ * tn_ * 4
        per_k = 2 * (tm_ * xi + tn_ * wi)
        return (budget - fixed) // per_k

    # Only if even tk=128 would not fit do we shrink the M/N tiles.
    while _max_tk(tm_eff, tn_eff) < 128 and (tm_eff > sub or tn_eff > 128):
        if tm_eff > sub:
            tm_eff = max(sub, (tm_eff // 2 // sub) * sub)
        else:
            tn_eff = max(128, (tn_eff // 2 // 128) * 128)

    gm = pl.cdiv(m_min, tm_eff)
    gn = pl.cdiv(n_min, tn_eff)
    M_pad = gm * tm_eff
    N_pad = gn * tn_eff

    tk_limit = max(128, (_max_tk(tm_eff, tn_eff) // 128) * 128)
    if tk is not None:
        tk_limit = min(tk_limit, max(128, _round_up(tk, 128)))
    gk = pl.cdiv(k_min, min(k_min, tk_limit))
    tk_eff = _round_up(pl.cdiv(k_min, gk), 128)
    K_pad = gk * tk_eff

    # ---- zero-pad ragged dims (numerically inert; sliced away afterwards) ----
    if (M_pad, K_pad) != (M, K):
        x2 = jnp.pad(x2, ((0, M_pad - M), (0, K_pad - K)))
    if (K_pad, N_pad) != (K, N):
        wT = jnp.pad(wT, ((0, K_pad - K), (0, N_pad - N)))
    if N_pad != N:
        b2 = jnp.pad(b2, ((0, 0), (0, N_pad - N)))

    grid = (gm, gn, gk)

    # double-buffered tiles + f32 accumulator, per-operand itemsizes
    footprint = (2 * (tm_eff * tk_eff * xi + tk_eff * tn_eff * wi + tn_eff * bi)
                 + 2 * tm_eff * tn_eff * oi + tm_eff * tn_eff * 4)
    vmem_limit = min(_VMEM_CAP * 85 // 100,
                     max(32 << 20, footprint + footprint // 4 + (2 << 20)))

    cost = pl.CostEstimate(
        flops=2 * M_pad * K_pad * N_pad,
        transcendentals=0,
        bytes_accessed=(gn * M_pad * K_pad * xi       # x re-streamed per N tile
                        + gm * K_pad * N_pad * wi     # W re-streamed per M tile
                        + M_pad * N_pad * oi
                        + gm * N_pad * bi),
    )

    out = pl.pallas_call(
        _proj_kernel,
        out_shape=jax.ShapeDtypeStruct((M_pad, N_pad), x.dtype),
        grid_spec=pltpu.PrefetchScalarGridSpec(
            num_scalar_prefetch=0,
            grid=grid,
            in_specs=[
                pl.BlockSpec((tm_eff, tk_eff), lambda i, j, k: (i, k)),  # x
                pl.BlockSpec((tk_eff, tn_eff), lambda i, j, k: (k, j)),  # W^T
                pl.BlockSpec((1, tn_eff), lambda i, j, k: (0, j)),       # bias
            ],
            out_specs=pl.BlockSpec((tm_eff, tn_eff), lambda i, j, k: (i, j)),
            scratch_shapes=[pltpu.VMEM((tm_eff, tn_eff), jnp.float32)],
        ),
        compiler_params=pltpu.CompilerParams(
            dimension_semantics=("parallel", "parallel", "arbitrary"),
            vmem_limit_bytes=int(vmem_limit),
        ),
        cost_estimate=cost,
    )(x2, wT, b2)

    return out[:M, :N].reshape(B, P, N)


def init_params(key, latent_dim, patch_len, d_llm, dtype=jnp.float32):
    """Deterministic nn.Linear-style init: U(-1/sqrt(fan_in), 1/sqrt(fan_in))."""
    fan_in = patch_len * latent_dim
    k_w, k_b = jax.random.split(key)
    bound = 1.0 / jnp.sqrt(fan_in)
    weight = jax.random.uniform(k_w, (d_llm, fan_in), dtype, -bound, bound)
    bias = jax.random.uniform(k_b, (d_llm,), dtype, -bound, bound)
    return weight, bias


def _reference(x, weight, bias, patch_len):
    B, L, D = x.shape
    P = L // patch_len
    xp = x.reshape(B, P, patch_len * D)
    return jnp.einsum("bpk,nk->bpn", xp, weight) + bias


if __name__ == "__main__":
    key = jax.random.PRNGKey(0)
    k_x, k_p, k_x2, k_p2, k_x3, k_p3 = jax.random.split(key, 6)

    # --- small shapes consistent with the module ---
    B, latent_dim, patch_len, d_llm, L = 2, 8, 4, 32, 32      # M=16, K=32, N=32
    x = jax.random.normal(k_x, (B, L, latent_dim), jnp.float32)
    weight, bias = init_params(k_p, latent_dim, patch_len, d_llm)
    out = jax.block_until_ready(
        latent_patching_projection(x, weight, bias, patch_len=patch_len))
    ref = _reference(x, weight, bias, patch_len)
    assert out.shape == (B, L // patch_len, d_llm)
    assert jnp.allclose(out, ref, atol=1e-5, rtol=1e-5)

    # --- multi-tile M/N grid with ragged-N padding (320 -> 384) ---
    B2, latent2, plen2, dllm2, L2 = 2, 16, 4, 320, 64         # M=32, K=64, N=320
    x_b = jax.random.normal(k_x2, (B2, L2, latent2), jnp.float32)
    w_b, b_b = init_params(k_p2, latent2, plen2, dllm2)
    out_b = jax.block_until_ready(latent_patching_projection(
        x_b, w_b, b_b, patch_len=plen2, tm=16, tn=128))        # grid = (2, 3, 1)
    ref_b = _reference(x_b, w_b, b_b, plen2)
    assert out_b.shape == (B2, L2 // plen2, dllm2)
    assert jnp.allclose(out_b, ref_b, atol=1e-5, rtol=1e-5)

    # --- forced K tiling exercising the f32 accumulator / reduction axis ---
    B3, latent3, plen3, dllm3, L3 = 2, 32, 8, 256, 64          # M=16, K=256, N=256
    x_c = jax.random.normal(k_x3, (B3, L3, latent3), jnp.float32)
    w_c, b_c = init_params(k_p3, latent3, plen3, dllm3)
    out_c = jax.block_until_ready(latent_patching_projection(
        x_c, w_c, b_c, patch_len=plen3, tk=128))               # grid = (2, 1, 2)
    ref_c = _reference(x_c, w_c, b_c, plen3)
    assert out_c.shape == (B3, L3 // plen3, dllm3)
    assert jnp.allclose(out_c, ref_c, atol=1e-4, rtol=1e-4)

    print("KERNEL_OK")
</pallas_src>

<mosaic_0001>
module attributes {stable_mosaic.version = 11 : i64} {
  func.func @_proj_kernel(%arg0: i32, %arg1: i32, %arg2: i32, %arg3: memref<8x128xf32, #tpu.memory_space<vmem>>, %arg4: memref<128x128xf32, #tpu.memory_space<vmem>>, %arg5: memref<1x128xf32, #tpu.memory_space<vmem>>, %arg6: memref<8x128xf32, #tpu.memory_space<vmem>>, %arg7: memref<8x128xf32, #tpu.memory_space<vmem>>) attributes {dimension_semantics = [#tpu.dimension_semantics<parallel>, #tpu.dimension_semantics<parallel>, #tpu.dimension_semantics<arbitrary>], iteration_bounds = array<i64: 2, 1, 1>, scalar_prefetch = 0 : i64, scratch_operands = 1 : i64, tpu.core_type = #tpu.core_type<tc>, window_params = [{transform_indices = @transform_0, window_bounds = array<i64: 8, 128>}, {transform_indices = @transform_1, window_bounds = array<i64: 128, 128>}, {transform_indices = @transform_2, window_bounds = array<i64: 1, 128>}, {transform_indices = @transform_3, window_bounds = array<i64: 8, 128>}]} {
    %c0_i32 = arith.constant 0 : i32
    %0 = arith.cmpi eq, %arg2, %c0_i32 : i32
    %1 = arith.extui %0 : i1 to i32
    %c0_i32_0 = arith.constant 0 : i32
    %2 = arith.cmpi ne, %1, %c0_i32_0 : i32
    scf.if %2 {
      %cst_10 = arith.constant 0.000000e+00 : f32
      %12 = vector.broadcast %cst_10 : f32 to vector<8x128xf32>
      %c0_11 = arith.constant 0 : index
      %c0_12 = arith.constant 0 : index
      %13 = vector.load %arg7[%c0_11, %c0_12] : memref<8x128xf32, #tpu.memory_space<vmem>>, vector<8x128xf32>
      tpu.vector_store %arg7[%c0_11, %c0_12], %12 {strides = array<i32>} : memref<8x128xf32, #tpu.memory_space<vmem>>, vector<8x128xf32>,
    } else {
    }
    %c0 = arith.constant 0 : index
    %c0_1 = arith.constant 0 : index
    %3 = vector.load %arg7[%c0, %c0_1] : memref<8x128xf32, #tpu.memory_space<vmem>>, vector<8x128xf32>
    %c0_2 = arith.constant 0 : index
    %c0_3 = arith.constant 0 : index
    %4 = vector.load %arg3[%c0_2, %c0_3] : memref<8x128xf32, #tpu.memory_space<vmem>>, vector<8x128xf32>
    %c0_4 = arith.constant 0 : index
    %c0_5 = arith.constant 0 : index
    %5 = vector.load %arg4[%c0_4, %c0_5] : memref<128x128xf32, #tpu.memory_space<vmem>>, vector<128x128xf32>
    %cst = arith.constant dense<0.000000e+00> : vector<8x128xf32>
    %6 = tpu.matmul %4, %5, %cst {dimension_numbers = #tpu.dot_dimension_numbers<[1], [0], [0], [1], [0, 0, 1, 1], [], []>} : vector<8x128xf32>, vector<128x128xf32>, vector<8x128xf32> -> vector<8x128xf32>
    %7 = arith.addf %3, %6 : vector<8x128xf32>
    %c0_6 = arith.constant 0 : index
    %c0_7 = arith.constant 0 : index
    %8 = vector.load %arg7[%c0_6, %c0_7] : memref<8x128xf32, #tpu.memory_space<vmem>>, vector<8x128xf32>
    tpu.vector_store %arg7[%c0_6, %c0_7], %7 {strides = array<i32>} : memref<8x128xf32, #tpu.memory_space<vmem>>, vector<8x128xf32>,
    %c0_i32_8 = arith.constant 0 : i32
    %9 = arith.cmpi eq, %arg2, %c0_i32_8 : i32
    %10 = arith.extui %9 : i1 to i32
    %c0_i32_9 = arith.constant 0 : i32
    %11 = arith.cmpi ne, %10, %c0_i32_9 : i32
    scf.if %11 {
      %c0_10 = arith.constant 0 : index
      %c0_11 = arith.constant 0 : index
      %12 = vector.load %arg7[%c0_10, %c0_11] : memref<8x128xf32, #tpu.memory_space<vmem>>, vector<8x128xf32>
      %c0_12 = arith.constant 0 : index
      %c0_13 = arith.constant 0 : index
      %13 = vector.load %arg5[%c0_12, %c0_13] : memref<1x128xf32, #tpu.memory_space<vmem>>, vector<1x128xf32>
      %14 = vector.broadcast %13 : vector<1x128xf32> to vector<8x128xf32>
      %15 = arith.addf %12, %14 : vector<8x128xf32>
      %c0_14 = arith.constant 0 : index
      %c0_15 = arith.constant 0 : index
      %16 = vector.load %arg6[%c0_14, %c0_15] : memref<8x128xf32, #tpu.memory_space<vmem>>, vector<8x128xf32>
      tpu.vector_store %arg6[%c0_14, %c0_15], %15 {strides = array<i32>} : memref<8x128xf32, #tpu.memory_space<vmem>>, vector<8x128xf32>,
    } else {
    }
    return
  }
  func.func @transform_0(%arg0: i32, %arg1: i32, %arg2: i32) -> (i32, i32) {
    %c0_i32 = arith.constant 0 : i32
    return %arg0, %arg2 : i32, i32
  }
  func.func @transform_1(%arg0: i32, %arg1: i32, %arg2: i32) -> (i32, i32) {
    %c0_i32 = arith.constant 0 : i32
    return %arg2, %arg1 : i32, i32
  }
  func.func @transform_2(%arg0: i32, %arg1: i32, %arg2: i32) -> (i32, i32) {
    %c0_i32 = arith.constant 0 : i32
    %c0_i32_0 = arith.constant 0 : i32
    return %c0_i32, %arg1 : i32, i32
  }
  func.func @transform_3(%arg0: i32, %arg1: i32, %arg2: i32) -> (i32, i32) {
    %c0_i32 = arith.constant 0 : i32
    return %arg0, %arg1 : i32, i32
  }
}

</mosaic_0001>

<llo_original>
// kernel: latent_patching_projection.1
$region0: #{latent_patching_projection.1}
  #allocation0 [shape = 'u32[]', space=smem, size = 0x4, offset = 0x4, fixed_abs, tag = 'smem constant byte address 0x4 - core index']
  #allocation1 [shape = 'u32[144,128]{1,0:T(1,128)}', space=vmem, size = 0x12000, scoped, tag = 'internal scratch']
  #allocation2 [shape = 'f32[8,128]{1,0:T(8,128)}', space=vmem, size = 0x1000, scoped, tag = 'scratch operand']
  %s0 = inlined_call_operand.vmem [shape: f32[16,128], index: 0, kind: input, shape index: {}]
  %s1 = inlined_call_operand.vmem [shape: f32[128,128], index: 1, kind: input, shape index: {}]
  %s2 = inlined_call_operand.vmem [shape: f32[1,128], index: 2, kind: input, shape index: {}]
  %s3 = inlined_call_operand.vmem [shape: f32[16,128], index: 3, kind: output, shape index: {}]
  %s4 = sld [smem:[#allocation0]]
  $region53: #{latent_patching_projection.1} parent=0
    _
  %s6 = ssub.s32 1, %s4
  %s7 = scalar_select 0, %s6, %s4
  loop: start=0, step=1, limit=4
  $region2: #{latent_patching_projection.1} parent=0 // loop_pre_header
    _
  $region3: #{latent_patching_projection.1} parent=0 // loop_header
    %s9 = sphi 0, %s13
    %p10 = scmp.ge.s32.totalorder %s9, 4
    %s16 = sphi 0, %s35
    %s17 = sphi 0, %s31
    %s18 = sphi 0, %s27
    %s19 = sphi 0, %s16
    %s20 = sphi 0, %s17
    %s21 = sphi 0, %s18
    %s22 = sphi 0, %s19
    %s23 = sphi 0, %s20
    %s24 = sphi 0, %s21
    %s40 = sphi 0, %s42
    %s43 = sphi 0, %s40
    %s44 = sphi 0, %s43
    %s60 = sphi 0, %s44
    %s68 = sphi 0, %s70
    %s71 = sphi 0, %s68
    %s72 = sphi 0, %s71
    %s88 = sphi 0, %s72
    %s94 = sphi 0, %s96
    %s97 = sphi 0, %s94
    %s98 = sphi 0, %s97
    %s114 = sphi 0, %s98
    %s122 = sphi 0, %s124
    %s125 = sphi 0, %s122
    %s126 = sphi 0, %s125
    %s142 = sphi 0, %s126
  $region4: #{latent_patching_projection.1} parent=0 // loop_header_branch
    %12 = sbr.rel (%p10) target = $region8
  $region5: #{latent_patching_projection.1} parent=0 // loop_body
    %s14 = ssub.s32 %s9, 1
    %s15 = ssub.s32 %s9, 2
    %s25 = sadd.s32 1, %s18
    %p26 = scmp.ge.s32.totalorder %s25, 1
    %s27 = scalar_select %p26, 0, %s25
    %s28 = sadd.s32 1, %s17
    %s29 = scalar_select %p26, %s28, %s17
    %p30 = scmp.ge.s32.totalorder %s29, 1
    %s31 = scalar_select %p30, 0, %s29
    %s32 = sadd.s32 1, %s16
    %s33 = scalar_select %p30, %s32, %s16
    %p34 = scmp.ge.s32.totalorder %s33, 2
    %s35 = scalar_select %p34, 0, %s33
    %s36 = ssub.s32 %s16, %s35
    %s37 = ssub.s32 %s18, %s27
    %s38 = sor.u32 %s36, %s37
    %p39 = scmp.eq.s32.totalorder %s38, 0
    %s41 = sadd.s32 %s40, 1
    %s42 = scalar_select %p39, %s40, %s41
    %p45 = pneg %p39
    %p46 = scmp.eq.s32.totalorder %s9, 1
    %p47 = por %p45, %p46
    %p48 = scmp.ne.s32.totalorder %s40, %s43
    %p49 = scmp.eq.s32.totalorder %s9, 0
    %p50 = por %p48, %p49
    %p51 = scmp.ne.s32.totalorder %s40, %s43
    %p52 = scmp.eq.s32.totalorder %s14, 1
    %p53 = por %p51, %p52
    %p54 = scmp.ne.s32.totalorder %s43, %s44
    %p55 = scmp.eq.s32.totalorder %s14, 0
    %p56 = por %p54, %p55
    %p57 = scmp.ne.s32.totalorder %s43, %s44
    %p58 = scmp.eq.s32.totalorder %s15, 1
    %p59 = por %p57, %p58
    %p61 = scmp.ne.s32.totalorder %s44, %s60
    %p62 = scmp.eq.s32.totalorder %s15, 0
    %p63 = por %p61, %p62
    %s64 = ssub.s32 %s18, %s27
    %s65 = ssub.s32 %s17, %s31
    %s66 = sor.u32 %s64, %s65
    %p67 = scmp.eq.s32.totalorder %s66, 0
    %s69 = sadd.s32 %s68, 1
    %s70 = scalar_select %p67, %s68, %s69
    %p73 = pneg %p67
    %p74 = scmp.eq.s32.totalorder %s9, 1
    %p75 = por %p73, %p74
    %p76 = scmp.ne.s32.totalorder %s68, %s71
    %p77 = scmp.eq.s32.totalorder %s9, 0
    %p78 = por %p76, %p77
    %p79 = scmp.ne.s32.totalorder %s68, %s71
    %p80 = scmp.eq.s32.totalorder %s14, 1
    %p81 = por %p79, %p80
    %p82 = scmp.ne.s32.totalorder %s71, %s72
    %p83 = scmp.eq.s32.totalorder %s14, 0
    %p84 = por %p82, %p83
    %p85 = scmp.ne.s32.totalorder %s71, %s72
    %p86 = scmp.eq.s32.totalorder %s15, 1
    %p87 = por %p85, %p86
    %p89 = scmp.ne.s32.totalorder %s72, %s88
    %p90 = scmp.eq.s32.totalorder %s15, 0
    %p91 = por %p89, %p90
    %s92 = ssub.s32 %s17, %s31
    %p93 = scmp.eq.s32.totalorder %s92, 0
    %s95 = sadd.s32 %s94, 1
    %s96 = scalar_select %p93, %s94, %s95
    %p99 = pneg %p93
    %p100 = scmp.eq.s32.totalorder %s9, 1
    %p101 = por %p99, %p100
    %p102 = scmp.ne.s32.totalorder %s94, %s97
    %p103 = scmp.eq.s32.totalorder %s9, 0
    %p104 = por %p102, %p103
    %p105 = scmp.ne.s32.totalorder %s94, %s97
    %p106 = scmp.eq.s32.totalorder %s14, 1
    %p107 = por %p105, %p106
    %p108 = scmp.ne.s32.totalorder %s97, %s98
    %p109 = scmp.eq.s32.totalorder %s14, 0
    %p110 = por %p108, %p109
    %p111 = scmp.ne.s32.totalorder %s97, %s98
    %p112 = scmp.eq.s32.totalorder %s15, 1
    %p113 = por %p111, %p112
    %p115 = scmp.ne.s32.totalorder %s98, %s114
    %p116 = scmp.eq.s32.totalorder %s15, 0
    %p117 = por %p115, %p116
    %s118 = ssub.s32 %s16, %s35
    %s119 = ssub.s32 %s17, %s31
    %s120 = sor.u32 %s118, %s119
    %p121 = scmp.eq.s32.totalorder %s120, 0
    %s123 = sadd.s32 %s122, 1
    %s124 = scalar_select %p121, %s122, %s123
    %p127 = pneg %p121
    %p128 = scmp.eq.s32.totalorder %s9, 1
    %p129 = por %p127, %p128
    %p130 = scmp.ne.s32.totalorder %s122, %s125
    %p131 = scmp.eq.s32.totalorder %s9, 0
    %p132 = por %p130, %p131
    %p133 = scmp.ne.s32.totalorder %s122, %s125
    %p134 = scmp.eq.s32.totalorder %s14, 1
    %p135 = por %p133, %p134
    %p136 = scmp.ne.s32.totalorder %s125, %s126
    %p137 = scmp.eq.s32.totalorder %s14, 0
    %p138 = por %p136, %p137
    %p139 = scmp.ne.s32.totalorder %s125, %s126
    %p140 = scmp.eq.s32.totalorder %s15, 1
    %p141 = por %p139, %p140
    %p143 = scmp.ne.s32.totalorder %s126, %s142
    %p144 = scmp.eq.s32.totalorder %s15, 0
    %p145 = por %p143, %p144
    %p146 = scmp.le.s32.totalorder 1, %s9
    %p147 = scmp.lt.s32.totalorder %s9, 3
    %p148 = pnand %p146, %p147
    %p149 = pneg %p148
    // Predicated region
    $region9: #{latent_patching_projection.1} parent=5 // pred_check
      _
    $region10: #{latent_patching_projection.1} parent=5 // pred_check_branch
      %151 = sbr.rel (%p148) target = $region12
    $region11: #{latent_patching_projection.1} parent=5 // pred_region
      %s152 = ssub.s32 %s9, 1
      // Predicated region
      $region13: #{latent_patching_projection.1} parent=11 // pred_check
        %p153 = pneg %p84
      $region14: #{latent_patching_projection.1} parent=11 // pred_check_branch
        %155 = sbr.rel (%p153) target = $region16
      $region15: #{latent_patching_projection.1} parent=11 // pred_region
        %s156 = smul.u32 16, %s21
        %p157 = scmp.lt.s32.totalorder %s156, 15
        %s158 = scalar_select %p157, %s156, 15
        %p159 = scmp.lt.s32.totalorder %s20, 0
        %s160 = scalar_select %p159, %s20, 0
        %s161 = sadd.s32 %s160, %s158
        %s162 = smul.addr %s161, 8
        %s163 = scalar_lea.vmem %s1, %s162
        %s164 = smul.u32 16, %s21
      $region16: #{latent_patching_projection.1} parent=11 // pred_fallthru
        _
      // Predicated region
      $region17: #{latent_patching_projection.1} parent=11 // pred_check
        %p165 = pneg %p110
      $region18: #{latent_patching_projection.1} parent=11 // pred_check_branch
        %167 = sbr.rel (%p165) target = $region20
      $region19: #{latent_patching_projection.1} parent=11 // pred_region
        %p168 = scmp.lt.s32.totalorder %s20, 0
        %s169 = scalar_select %p168, %s20, 0
        %s170 = scalar_lea.vmem %s2, %s169
      $region20: #{latent_patching_projection.1} parent=11 // pred_fallthru
        _
    $region12: #{latent_patching_projection.1} parent=5 // pred_fallthru
      _
    %p171 = scmp.lt.s32.totalorder %s9, 2
    // Predicated region
    $region21: #{latent_patching_projection.1} parent=5 // pred_check
      %p172 = pneg %p171
    $region22: #{latent_patching_projection.1} parent=5 // pred_check_branch
      %174 = sbr.rel (%p172) target = $region24
    $region23: #{latent_patching_projection.1} parent=5 // pred_region
      // Predicated region
      $region25: #{latent_patching_projection.1} parent=23 // pred_check
        %p175 = pneg %p50
      $region26: #{latent_patching_projection.1} parent=23 // pred_check_branch
        %177 = sbr.rel (%p175) target = $region28
      $region27: #{latent_patching_projection.1} parent=23 // pred_region
        %p178 = scmp.lt.s32.totalorder %s16, 1
        %s179 = scalar_select %p178, %s16, 1
        %p180 = scmp.lt.s32.totalorder %s18, 0
        %s181 = scalar_select %p180, %s18, 0
        %s182 = sadd.s32 %s181, %s179
        %s183 = smul.addr %s182, 8
        %s184 = scalar_lea.vmem %s0, %s183
      $region28: #{latent_patching_projection.1} parent=23 // pred_fallthru
        _
    $region24: #{latent_patching_projection.1} parent=5 // pred_fallthru
      _
    %p185 = scmp.le.s32.totalorder 1, %s9
    %p186 = scmp.lt.s32.totalorder %s9, 3
    %p187 = pnand %p185, %p186
    %p188 = pneg %p187
    // Predicated region
    $region29: #{latent_patching_projection.1} parent=5 // pred_check
      _
    $region30: #{latent_patching_projection.1} parent=5 // pred_check_branch
      %190 = sbr.rel (%p187) target = $region32
    $region31: #{latent_patching_projection.1} parent=5 // pred_region
      %s191 = ssub.s32 %s9, 1
      %p192 = scmp.lt.s32.totalorder %s19, 1
      %s193 = scalar_select %p192, %s19, 1
      %p194 = scmp.lt.s32.totalorder %s21, 0
      %s195 = scalar_select %p194, %s21, 0
      %s196 = sadd.s32 %s195, %s193
      %s197 = smul.addr %s196, 8
      %s198 = scalar_lea.vmem %s0, %s197
      %p199 = pneg %p56
      %p200 = pneg %p53
      %s201 = smul.u32 16, %s21
      %p202 = scmp.lt.s32.totalorder %s201, 15
      %s203 = scalar_select %p202, %s201, 15
      %p204 = scmp.lt.s32.totalorder %s20, 0
      %s205 = scalar_select %p204, %s20, 0
      %s206 = sadd.s32 %s205, %s203
      %s207 = smul.addr %s206, 8
      %s208 = scalar_lea.vmem %s1, %s207
      %p209 = pneg %p84
      %p210 = pneg %p81
      %p211 = scmp.lt.s32.totalorder %s20, 0
      %s212 = scalar_select %p211, %s20, 0
      %s213 = scalar_lea.vmem %s2, %s212
      %p214 = pneg %p110
      %p215 = pneg %p107
      %p216 = pneg %p138
      %p217 = pneg %p135
      %p218 = scmp.lt.s32.totalorder %s19, 1
      %s219 = scalar_select %p218, %s19, 1
      %p220 = scmp.lt.s32.totalorder %s20, 0
      %s221 = scalar_select %p220, %s20, 0
      %s222 = sadd.s32 %s221, %s219
      %s223 = smul.addr %s222, 8
      %s224 = scalar_lea.vmem %s3, %s223
      %p225 = scmp.lt.s32.totalorder %s19, 1
      %s226 = scalar_select %p225, %s19, 1
      %p227 = scmp.lt.s32.totalorder %s21, 0
      %s228 = scalar_select %p227, %s21, 0
      %s229 = sadd.s32 %s228, %s226
      %s230 = smul.addr %s229, 8
      %s231 = scalar_lea.vmem %s0, %s230
      %s232 = smul.u32 16, %s21
      %p233 = scmp.lt.s32.totalorder %s232, 15
      %s234 = scalar_select %p233, %s232, 15
      %p235 = scmp.lt.s32.totalorder %s20, 0
      %s236 = scalar_select %p235, %s20, 0
      %s237 = sadd.s32 %s236, %s234
      %s238 = smul.addr %s237, 8
      %s239 = scalar_lea.vmem %s1, %s238
      %s240 = smul.u32 16, %s21
      %p241 = scmp.lt.s32.totalorder %s20, 0
      %s242 = scalar_select %p241, %s20, 0
      %s243 = scalar_lea.vmem %s2, %s242
      %p244 = scmp.lt.s32.totalorder %s19, 1
      %s245 = scalar_select %p244, %s19, 1
      %p246 = scmp.lt.s32.totalorder %s20, 0
      %s247 = scalar_select %p246, %s20, 0
      %s248 = sadd.s32 %s247, %s245
      %s249 = smul.addr %s248, 8
      %s250 = scalar_lea.vmem %s3, %s249
      %p251 = scmp.eq.s32.totalorder %s21, 0
      // Predicated region
      $region33: #{latent_patching_projection.1} parent=31 // pred_check
        %p252 = pneg %p251
      $region34: #{latent_patching_projection.1} parent=31 // pred_check_branch
        %254 = sbr.rel (%p252) target = $region36
      $region35: #{latent_patching_projection.1} parent=31 // pred_region
        %255 = vst [vmem:[#allocation2] sm:$0xff] 0.0
      $region36: #{latent_patching_projection.1} parent=31 // pred_fallthru
        _
      %v256 = vld [vmem:[#allocation2] sm:$0xff]
      %v257 = vld [vmem:[%s231] sm:$0xff]
      %v258 = vld [vmem:[%s239] sm:$0xff]
      %v259 = vld [vmem:[%s239 + $0x8] sm:$0xff]
      %v260 = vld [vmem:[%s239 + $0x10] sm:$0xff]
      %v261 = vld [vmem:[%s239 + $0x18] sm:$0xff]
      %v262 = vld [vmem:[%s239 + $0x20] sm:$0xff]
      %v263 = vld [vmem:[%s239 + $0x28] sm:$0xff]
      %v264 = vld [vmem:[%s239 + $0x30] sm:$0xff]
      %v265 = vld [vmem:[%s239 + $0x38] sm:$0xff]
      %v266 = vld [vmem:[%s239 + $0x40] sm:$0xff]
      %v267 = vld [vmem:[%s239 + $0x48] sm:$0xff]
      %v268 = vld [vmem:[%s239 + $0x50] sm:$0xff]
      %v269 = vld [vmem:[%s239 + $0x58] sm:$0xff]
      %v270 = vld [vmem:[%s239 + $0x60] sm:$0xff]
      %v271 = vld [vmem:[%s239 + $0x68] sm:$0xff]
      %v272 = vld [vmem:[%s239 + $0x70] sm:$0xff]
      %v273 = vld [vmem:[%s239 + $0x78] sm:$0xff]
      %274 = vmatprep.subr.mxu0 0.0
      %275 = vmatpush1.msra.mxu0 %v258
      %276 = vmatprep.subr.mxu0 0.0
      %277 = vmatpush1.msra.mxu0 %v259
      %278 = vmatprep.subr.mxu0 0.0
      %279 = vmatpush1.msra.mxu0 %v260
      %280 = vmatprep.subr.mxu0 0.0
      %281 = vmatpush1.msra.mxu0 %v261
      %282 = vmatprep.subr.mxu0 0.0
      %283 = vmatpush1.msra.mxu0 %v262
      %284 = vmatprep.subr.mxu0 0.0
      %285 = vmatpush1.msra.mxu0 %v263
      %286 = vmatprep.subr.mxu0 0.0
      %287 = vmatpush1.msra.mxu0 %v264
      %288 = vmatprep.subr.mxu0 0.0
      %289 = vmatpush1.msra.mxu0 %v265
      %290 = vmatprep.subr.mxu0 0.0
      %291 = vmatpush1.msra.mxu0 %v266
      %292 = vmatprep.subr.mxu0 0.0
      %293 = vmatpush1.msra.mxu0 %v267
      %294 = vmatprep.subr.mxu0 0.0
      %295 = vmatpush1.msra.mxu0 %v268
      %296 = vmatprep.subr.mxu0 0.0
      %297 = vmatpush1.msra.mxu0 %v269
      %298 = vmatprep.subr.mxu0 0.0
      %299 = vmatpush1.msra.mxu0 %v270
      %300 = vmatprep.subr.mxu0 0.0
      %301 = vmatpush1.msra.mxu0 %v271
      %302 = vmatprep.subr.mxu0 0.0
      %303 = vmatpush1.msra.mxu0 %v272
      %304 = vmatprep.subr.mxu0 0.0
      %305 = vmatpush1.msra.mxu0 %v273
      %306 = vmatprep.subr.mxu0 0.0
      %307 = vmatpush1.msra.mxu0 0.0
      %308 = vmatprep.subr.mxu0 0.0
      %309 = vmatpush1.msra.mxu0 0.0
      %310 = vmatprep.subr.mxu0 0.0
      %311 = vmatpush1.msra.mxu0 0.0
      %312 = vmatprep.subr.mxu0 0.0
      %313 = vmatpush1.msra.mxu0 0.0
      %314 = vmatprep.subr.mxu0 0.0
      %315 = vmatpush1.msra.mxu0 0.0
      %316 = vmatprep.subr.mxu0 0.0
      %317 = vmatpush1.msra.mxu0 0.0
      %318 = vmatprep.subr.mxu0 0.0
      %319 = vmatpush1.msra.mxu0 0.0
      %320 = vmatprep.subr.mxu0 0.0
      %321 = vmatpush1.msra.mxu0 0.0
      %322 = vmatprep.subr.mxu0 0.0
      %323 = vmatpush1.msra.mxu0 0.0
      %324 = vmatprep.subr.mxu0 0.0
      %325 = vmatpush1.msra.mxu0 0.0
      %326 = vmatprep.subr.mxu0 0.0
      %327 = vmatpush1.msra.mxu0 0.0
      %328 = vmatprep.subr.mxu0 0.0
      %329 = vmatpush1.msra.mxu0 0.0
      %330 = vmatprep.subr.mxu0 0.0
      %331 = vmatpush1.msra.mxu0 0.0
      %332 = vmatprep.subr.mxu0 0.0
      %333 = vmatpush1.msra.mxu0 0.0
      %334 = vmatprep.subr.mxu0 0.0
      %335 = vmatpush1.msra.mxu0 0.0
      %336 = vmatprep.subr.mxu0 0.0
      %337 = vmatpush1.msra.mxu0 0.0
      %338 = vmatprep.mubr.f32.mxu0 0.0
      %339 = vmatmul.mubr.f32.gmra.mrb[0].mxu0 %v257
      %v340 = vpop.f32.mrb[0].mxu0
      %v341 = vadd.f32 0.0, %v340
      %v342 = vpop.f32.mrb[0].mxu0
      %343 = vdwg.mxu0
      %v344 = vadd.f32 %v256, %v341
      %345 = vst [vmem:[#allocation2] sm:$0xff] %v344
      // Predicated region
      $region37: #{latent_patching_projection.1} parent=31 // pred_check
        %p346 = pneg %p251
      $region38: #{latent_patching_projection.1} parent=31 // pred_check_branch
        %348 = sbr.rel (%p346) target = $region40
      $region39: #{latent_patching_projection.1} parent=31 // pred_region
        %v349 = vld [vmem:[#allocation2] sm:$0xff]
        %v350 = vld [vmem:[%s243] sm:$0x1]
        %v352 = vlaneseq
        %v353 = vshrl.u32 %v352, 7
        %v354 = vsub.s32 0, %v353
        %v355 = vrot.slane %v350, %v354
        %v357 = vadd.f32 %v349, %v355
        %358 = vst [vmem:[%s250] sm:$0xff] %v357
      $region40: #{latent_patching_projection.1} parent=31 // pred_fallthru
        _
      %p359 = scmp.lt.s32.totalorder %s19, 1
      %s360 = scalar_select %p359, %s19, 1
      %p361 = scmp.lt.s32.totalorder %s20, 0
      %s362 = scalar_select %p361, %s20, 0
      %s363 = sadd.s32 %s362, %s360
      %s364 = smul.addr %s363, 8
      %s365 = scalar_lea.vmem %s3, %s364
      // Predicated region
      $region41: #{latent_patching_projection.1} parent=31 // pred_check
        %p366 = pneg %p135
      $region42: #{latent_patching_projection.1} parent=31 // pred_check_branch
        %368 = sbr.rel (%p366) target = $region44
      $region43: #{latent_patching_projection.1} parent=31 // pred_region
        _
      $region44: #{latent_patching_projection.1} parent=31 // pred_fallthru
        _
    $region32: #{latent_patching_projection.1} parent=5 // pred_fallthru
      _
    %p369 = scmp.le.s32.totalorder 2, %s9
    // Predicated region
    $region45: #{latent_patching_projection.1} parent=5 // pred_check
      %p370 = pneg %p369
    $region46: #{latent_patching_projection.1} parent=5 // pred_check_branch
      %372 = sbr.rel (%p370) target = $region48
    $region47: #{latent_patching_projection.1} parent=5 // pred_region
      %s373 = ssub.s32 %s9, 2
      // Predicated region
      $region49: #{latent_patching_projection.1} parent=47 // pred_check
        %p374 = pneg %p141
      $region50: #{latent_patching_projection.1} parent=47 // pred_check_branch
        %376 = sbr.rel (%p374) target = $region52
      $region51: #{latent_patching_projection.1} parent=47 // pred_region
        %p377 = scmp.lt.s32.totalorder %s22, 1
        %s378 = scalar_select %p377, %s22, 1
        %p379 = scmp.lt.s32.totalorder %s23, 0
        %s380 = scalar_select %p379, %s23, 0
        %s381 = sadd.s32 %s380, %s378
        %s382 = smul.addr %s381, 8
        %s383 = scalar_lea.vmem %s3, %s382
      $region52: #{latent_patching_projection.1} parent=47 // pred_fallthru
        _
    $region48: #{latent_patching_projection.1} parent=5 // pred_fallthru
      _
  $region6: #{latent_patching_projection.1} parent=0 // loop_footer
    %s13 = sadd.s32 1, %s9
  $region7: #{latent_patching_projection.1} parent=0 // loop_footer_branch
    %8 = sbr.rel target = $region3
  $region8: #{latent_patching_projection.1} parent=0 // loop_exit
    _

</llo_original>
